<compile_context>
chip_gen: v7x
topology: tpu7x:2x2x1
jax: 0.10.0
libtpu: 0.0.40
codegen_flags: <defaults>
</compile_context>

<pallas_src>
import jax
import jax.numpy as jnp
from jax.experimental import pallas as pl
from jax.experimental.pallas import tpu as pltpu


def _mlp_kernel(x_ref, w1t_ref, b1_ref, w2t_ref, b2_ref, w1_ref, b3_ref, o_ref):
    """Fused 3-layer MLP on one (TB, I) activation tile.

    Operands (wrapper-prepared, MXU-natural (K, N) orientation):
      w1t_ref: (I, H)  -- fc1.weight.T, compute dtype
      w2t_ref: (H, H)  -- fc2.weight.T (frozen, pre-transposed), compute dtype
      w1_ref : (H, I)  -- fc1.weight  (serves fc3 via the weight tie), compute dtype
      b*_ref : f32 rows (1, H) / (1, H) / (1, O)
    The activation tile is cast to the compute dtype in-kernel; accumulation
    and bias adds stay f32.
    """
    cd = w1t_ref.dtype
    x = x_ref[...].astype(cd)                                        # (TB, I)

    # fc1: x @ w1.T
    h = jnp.dot(x, w1t_ref[...], preferred_element_type=jnp.float32)
    h = h + b1_ref[...]

    # fc2: h @ w2.T  (w2 pre-transposed in the wrapper -> natural orientation)
    h = jnp.dot(h.astype(cd), w2t_ref[...], preferred_element_type=jnp.float32)
    h = h + b2_ref[...]

    # fc3: weight tied to fc1.weight.T, so fc3(h) = h @ w1 + b3
    h = jnp.dot(h.astype(cd), w1_ref[...], preferred_element_type=jnp.float32)
    h = h + b3_ref[...]

    o_ref[...] = h.astype(o_ref.dtype)


def _vmem_capacity_bytes():
    """Physical VMEM bytes for the current chip (conservative fallback)."""
    try:
        info = pltpu.get_tpu_info()
        cap = getattr(info, "vmem_capacity_bytes", None)
        if cap:
            return int(cap)
    except Exception:
        pass
    return 64 * 1024 * 1024  # v7x per-TC size; safe lower bound everywhere


def _resident_spec(shape):
    """BlockSpec for a VMEM-resident, constant-block-index operand.

    Single-buffered (pipeline_mode=Buffered(1)) so weights/biases that never
    change block index are not double-buffered.  Falls back to the default
    spec on jax versions without pipeline_mode.
    """
    buffered = getattr(pl, "Buffered", None)
    if buffered is not None:
        try:
            return pl.BlockSpec(shape, lambda i: (0, 0), pipeline_mode=buffered(1))
        except TypeError:
            pass
    return pl.BlockSpec(shape, lambda i: (0, 0))


def neural_network_forward(x, w1, b1, w2, b2, b3, *, block_b=1024,
                           compute_dtype=jnp.bfloat16, force_grid=False):
    """Fused forward pass of NeuralNetwork.

    Args (PyTorch nn.Linear conventions):
      x : (B, input_size)
      w1: (hidden_size, input_size)   -- fc1.weight (fc3.weight = w1.T is tied)
      b1: (hidden_size,)              -- fc1.bias
      w2: (hidden_size, hidden_size)  -- fc2.weight (precomputed, frozen)
      b2: (hidden_size,)              -- fc2.bias
      b3: (output_size,)              -- fc3.bias (output_size == input_size)
      block_b: batch-tile size for the streamed path (auto-shrunk to VMEM budget)
      compute_dtype: MXU-operand dtype (default bfloat16; accumulation and bias
        adds stay f32).  Pass None for exact input-dtype (f32) matmuls.
      force_grid: force the streamed/grid path (testing & benchmarking).
    """
    B, I = x.shape
    H = w1.shape[0]
    O = I  # tied weights force output_size == input_size
    assert b3.shape[0] == O, "fc3/fc1 weight tie requires output_size == input_size"

    cd = jnp.dtype(x.dtype if compute_dtype is None else compute_dtype)

    # Weights in MXU-natural (K, N) orientation.  The transposes are one-time
    # wrapper work (w2 is frozen; w1's transpose is paid once per call instead
    # of an XLU transpose per grid step).
    w1t = jnp.transpose(w1).astype(cd)   # (I, H) for fc1
    w2t = jnp.transpose(w2).astype(cd)   # (H, H) for fc2
    w1n = w1.astype(cd)                  # (H, I) for fc3

    # Biases as f32 rows for a 2-D broadcast add inside the kernel.
    b1r = b1.reshape(1, H).astype(jnp.float32)
    b2r = b2.reshape(1, H).astype(jnp.float32)
    b3r = b3.reshape(1, O).astype(jnp.float32)

    out_dtype = x.dtype
    xb = jnp.dtype(x.dtype).itemsize
    ob = jnp.dtype(out_dtype).itemsize
    cb = cd.itemsize

    # VMEM budgeting (explicit vmem_limit_bytes: v5e's 16 MiB scoped default is
    # too small; v7x only has 64 MiB physical per TC).
    cap = _vmem_capacity_bytes()
    vmem_limit = int(min((cap * 3) // 4, 96 * 1024 * 1024))

    weights_bytes = (I * H + H * H + H * I) * cb
    bias_bytes = (H + H + O) * 4
    single_bytes = (B * I * xb + B * O * ob          # x + out, single-buffered
                    + 2 * B * H * 4                  # intermediate activations
                    + weights_bytes + bias_bytes)

    if (not force_grid) and single_bytes <= vmem_limit // 2:
        # Everything fits comfortably in VMEM: one block, no grid, no
        # double-buffering / pipeline bookkeeping (~0.35 us per grid step).
        vmem = pl.BlockSpec(memory_space=pltpu.MemorySpace.VMEM)
        return pl.pallas_call(
            _mlp_kernel,
            out_shape=jax.ShapeDtypeStruct((B, O), out_dtype),
            in_specs=[vmem] * 7,
            out_specs=vmem,
            compiler_params=pltpu.CompilerParams(vmem_limit_bytes=vmem_limit),
        )(x, w1t, b1r, w2t, b2r, w1n, b3r)

    # Streamed path: activation tiles stream over a "parallel" batch axis
    # (sharded across TensorCores on megacore parts); weights/biases stay
    # VMEM-resident and single-buffered.  Last block may be ragged: Pallas
    # clips the writeback, and the per-row MLP never mixes rows, so the
    # garbage in out-of-bounds x rows is never observable.
    tb = max(8, (min(int(block_b), B) // 8) * 8)

    def _tile_vmem_bytes(t):
        return (2 * t * I * xb           # x tile (double-buffered)
                + 2 * t * O * ob         # out tile (double-buffered)
                + 2 * t * H * 4          # intermediate activations (rough)
                + weights_bytes + bias_bytes)

    while tb > 8 and _tile_vmem_bytes(tb) > (vmem_limit * 3) // 4:
        tb = max(8, ((tb // 2) // 8) * 8)

    grid = (pl.cdiv(B, tb),)
    return pl.pallas_call(
        _mlp_kernel,
        out_shape=jax.ShapeDtypeStruct((B, O), out_dtype),
        grid=grid,
        in_specs=[
            pl.BlockSpec((tb, I), lambda i: (i, 0)),   # x tile (streamed)
            _resident_spec((I, H)),                    # w1.T   (resident)
            _resident_spec((1, H)),                    # b1
            _resident_spec((H, H)),                    # w2.T   (resident)
            _resident_spec((1, H)),                    # b2
            _resident_spec((H, I)),                    # w1     (resident)
            _resident_spec((1, O)),                    # b3
        ],
        out_specs=pl.BlockSpec((tb, O), lambda i: (i, 0)),
        compiler_params=pltpu.CompilerParams(
            dimension_semantics=("parallel",),
            vmem_limit_bytes=vmem_limit),
    )(x, w1t, b1r, w2t, b2r, w1n, b3r)


def neural_network_forward_ref(x, w1, b1, w2, b2, b3):
    h = x @ w1.T + b1
    h = h @ w2.T + b2
    return h @ w1 + b3  # fc3.weight = fc1.weight.t()  =>  h @ (w1.T).T


if __name__ == "__main__":
    key = jax.random.PRNGKey(0)
    B, input_size, hidden_size = 8, 16, 32
    output_size = input_size  # required by the fc3/fc1 weight tie

    k = jax.random.split(key, 7)
    x = jax.random.normal(k[0], (B, input_size), dtype=jnp.float32)
    w1 = jax.random.normal(k[1], (hidden_size, input_size), dtype=jnp.float32) * 0.1
    b1 = jax.random.normal(k[2], (hidden_size,), dtype=jnp.float32) * 0.1
    # "precomputed_weights" for fc2 — deterministic synthetic values (frozen).
    w2 = jax.random.normal(k[3], (hidden_size, hidden_size), dtype=jnp.float32) * 0.1
    b2 = jax.random.normal(k[4], (hidden_size,), dtype=jnp.float32) * 0.1
    b3 = jax.random.normal(k[5], (output_size,), dtype=jnp.float32) * 0.1

    ref = neural_network_forward_ref(x, w1, b1, w2, b2, b3)

    # Exact f32 path (single VMEM block, no grid) — tight tolerance.
    out_f32 = jax.block_until_ready(
        neural_network_forward(x, w1, b1, w2, b2, b3, compute_dtype=None))
    assert out_f32.shape == (B, output_size)
    assert jnp.allclose(out_f32, ref, atol=1e-4, rtol=1e-4)

    # Default fast path (bf16 MXU operands, f32 accumulation) — loose tolerance.
    out_bf16 = jax.block_until_ready(
        neural_network_forward(x, w1, b1, w2, b2, b3))
    assert jnp.allclose(out_bf16, ref, atol=5e-2, rtol=5e-2)

    # Streamed / ragged-grid path: B=600 with block_b=512 -> 2 grid steps, the
    # last block partial (no jnp.pad / out[:B] round-trip).
    Bl = 600
    xl = jax.random.normal(k[6], (Bl, input_size), dtype=jnp.float32)
    ref_l = neural_network_forward_ref(xl, w1, b1, w2, b2, b3)

    out_l = jax.block_until_ready(
        neural_network_forward(xl, w1, b1, w2, b2, b3, block_b=512,
                               compute_dtype=None, force_grid=True))
    assert out_l.shape == (Bl, output_size)
    assert jnp.allclose(out_l, ref_l, atol=1e-4, rtol=1e-4)

    # Same streamed path with default bf16 MXU operands (in-kernel x cast).
    out_lb = jax.block_until_ready(
        neural_network_forward(xl, w1, b1, w2, b2, b3, block_b=512,
                               force_grid=True))
    assert jnp.allclose(out_lb, ref_l, atol=5e-2, rtol=5e-2)

    print("KERNEL_OK")
</pallas_src>

<mosaic_0001>
module attributes {stable_mosaic.version = 11 : i64} {
  func.func @_mlp_kernel(%arg0: memref<8x16xf32, #tpu.memory_space<vmem>>, %arg1: memref<16x32xf32, #tpu.memory_space<vmem>>, %arg2: memref<1x32xf32, #tpu.memory_space<vmem>>, %arg3: memref<32x32xf32, #tpu.memory_space<vmem>>, %arg4: memref<1x32xf32, #tpu.memory_space<vmem>>, %arg5: memref<32x16xf32, #tpu.memory_space<vmem>>, %arg6: memref<1x16xf32, #tpu.memory_space<vmem>>, %arg7: memref<8x16xf32, #tpu.memory_space<vmem>>) attributes {dimension_semantics = [], scalar_prefetch = 0 : i64, scratch_operands = 0 : i64, tpu.core_type = #tpu.core_type<tc>} {
    %c0 = arith.constant 0 : index
    %c0_0 = arith.constant 0 : index
    %0 = vector.load %arg0[%c0, %c0_0] : memref<8x16xf32, #tpu.memory_space<vmem>>, vector<8x16xf32>
    %c0_1 = arith.constant 0 : index
    %c0_2 = arith.constant 0 : index
    %1 = vector.load %arg1[%c0_1, %c0_2] : memref<16x32xf32, #tpu.memory_space<vmem>>, vector<16x32xf32>
    %cst = arith.constant dense<0.000000e+00> : vector<8x32xf32>
    %2 = tpu.matmul %0, %1, %cst {dimension_numbers = #tpu.dot_dimension_numbers<[1], [0], [0], [1], [0, 0, 1, 1], [], []>} : vector<8x16xf32>, vector<16x32xf32>, vector<8x32xf32> -> vector<8x32xf32>
    %c0_3 = arith.constant 0 : index
    %c0_4 = arith.constant 0 : index
    %3 = vector.load %arg2[%c0_3, %c0_4] : memref<1x32xf32, #tpu.memory_space<vmem>>, vector<1x32xf32>
    %4 = vector.broadcast %3 : vector<1x32xf32> to vector<8x32xf32>
    %5 = arith.addf %2, %4 : vector<8x32xf32>
    %c0_5 = arith.constant 0 : index
    %c0_6 = arith.constant 0 : index
    %6 = vector.load %arg3[%c0_5, %c0_6] : memref<32x32xf32, #tpu.memory_space<vmem>>, vector<32x32xf32>
    %cst_7 = arith.constant dense<0.000000e+00> : vector<8x32xf32>
    %7 = tpu.matmul %5, %6, %cst_7 {dimension_numbers = #tpu.dot_dimension_numbers<[1], [0], [0], [1], [0, 0, 1, 1], [], []>} : vector<8x32xf32>, vector<32x32xf32>, vector<8x32xf32> -> vector<8x32xf32>
    %c0_8 = arith.constant 0 : index
    %c0_9 = arith.constant 0 : index
    %8 = vector.load %arg4[%c0_8, %c0_9] : memref<1x32xf32, #tpu.memory_space<vmem>>, vector<1x32xf32>
    %9 = vector.broadcast %8 : vector<1x32xf32> to vector<8x32xf32>
    %10 = arith.addf %7, %9 : vector<8x32xf32>
    %c0_10 = arith.constant 0 : index
    %c0_11 = arith.constant 0 : index
    %11 = vector.load %arg5[%c0_10, %c0_11] : memref<32x16xf32, #tpu.memory_space<vmem>>, vector<32x16xf32>
    %cst_12 = arith.constant dense<0.000000e+00> : vector<8x16xf32>
    %12 = tpu.matmul %10, %11, %cst_12 {dimension_numbers = #tpu.dot_dimension_numbers<[1], [0], [0], [1], [0, 0, 1, 1], [], []>} : vector<8x32xf32>, vector<32x16xf32>, vector<8x16xf32> -> vector<8x16xf32>
    %c0_13 = arith.constant 0 : index
    %c0_14 = arith.constant 0 : index
    %13 = vector.load %arg6[%c0_13, %c0_14] : memref<1x16xf32, #tpu.memory_space<vmem>>, vector<1x16xf32>
    %14 = vector.broadcast %13 : vector<1x16xf32> to vector<8x16xf32>
    %15 = arith.addf %12, %14 : vector<8x16xf32>
    %c0_15 = arith.constant 0 : index
    %c0_16 = arith.constant 0 : index
    %16 = vector.load %arg7[%c0_15, %c0_16] : memref<8x16xf32, #tpu.memory_space<vmem>>, vector<8x16xf32>
    tpu.vector_store %arg7[%c0_15, %c0_16], %15 {strides = array<i32>} : memref<8x16xf32, #tpu.memory_space<vmem>>, vector<8x16xf32>,
    return
  }
}

</mosaic_0001>

<llo_original>
// kernel: tpu_custom_call.1
$region0: #{tpu_custom_call.1}
  #allocation0 [shape = 'u32[]', space=smem, size = 0x4, offset = 0x4, fixed_abs, tag = 'smem constant byte address 0x4 - core index']
  #allocation1 [shape = 'u32[144,128]{1,0:T(1,128)}', space=vmem, size = 0x12000, scoped, tag = 'internal scratch']
  %s0 = inlined_call_operand.hbm [shape: f32[8,16], index: 0, kind: input, shape index: {}]
  %s1 = inlined_call_operand.vmem [shape: f32[16,32], index: 1, kind: input, shape index: {}]
  %s2 = inlined_call_operand.vmem [shape: f32[1,32], index: 2, kind: input, shape index: {}]
  %s3 = inlined_call_operand.vmem [shape: f32[32,32], index: 3, kind: input, shape index: {}]
  %s4 = inlined_call_operand.vmem [shape: f32[1,32], index: 4, kind: input, shape index: {}]
  %s5 = inlined_call_operand.vmem [shape: f32[32,16], index: 5, kind: input, shape index: {}]
  %s6 = inlined_call_operand.vmem [shape: f32[1,16], index: 6, kind: input, shape index: {}]
  %s7 = inlined_call_operand.hbm [shape: f32[8,16], index: 7, kind: output, shape index: {}]
  %s8 = sld [smem:[#allocation0]]
  $region42: #{tpu_custom_call.1} parent=0
    _
  %s10 = ssub.s32 1, %s8
  %s11 = scalar_select 0, %s10, %s8
  $region1: #{tpu_custom_call.1} parent=0
    #allocation2 [shape = 'u8[4096]{0}', space=vmem, size = 0x1000, scoped, tag = 'input window, operand 0, single buffered']
    #allocation3 [shape = 's32[1]{0}', space=sflag, size = 0x4, scoped, tag = 'scoped memory for tpu_custom_call.1']
    #allocation4 [shape = 's32[1]{0}', space=sflag, size = 0x4, scoped, tag = 'scoped memory for tpu_custom_call.1']
    #allocation5 [shape = 'u8[4096]{0}', space=vmem, size = 0x1000, scoped, tag = 'output window, operand 0, single buffered']
    %12 = vsyncpa [#allocation3], 0
    %13 = vsyncpa [#allocation4], 0
    // Predicated region
    $region2: #{tpu_custom_call.1} parent=1 // pred_check
      _
    $region3: #{tpu_custom_call.1} parent=1 // pred_check_branch
      %15 = sbr.rel (0) target = $region5
    $region4: #{tpu_custom_call.1} parent=1 // pred_region
      %s17 = ssub.s32 128, 128
      %18 = vsyncadd [#allocation3], %s17
      %s20 = sshll.u32 [#allocation2], 4
      %s21 = int_to_ptr.vmem [resolvable:$true] %s20
      %23 = dma.hbm_to_vmem [thread:$0]  %s0, 128, %s21, [#allocation3]
    $region5: #{tpu_custom_call.1} parent=1 // pred_fallthru
      _
    // Predicated region
    $region6: #{tpu_custom_call.1} parent=1 // pred_check
      _
    $region7: #{tpu_custom_call.1} parent=1 // pred_check_branch
      %25 = sbr.rel (0) target = $region9
    $region8: #{tpu_custom_call.1} parent=1 // pred_region
      _
    $region9: #{tpu_custom_call.1} parent=1 // pred_fallthru
      _
    // Predicated region
    $region10: #{tpu_custom_call.1} parent=1 // pred_check
      _
    $region11: #{tpu_custom_call.1} parent=1 // pred_check_branch
      %27 = sbr.rel (0) target = $region13
    $region12: #{tpu_custom_call.1} parent=1 // pred_region
      _
    $region13: #{tpu_custom_call.1} parent=1 // pred_fallthru
      _
    // Predicated region
    $region14: #{tpu_custom_call.1} parent=1 // pred_check
      _
    $region15: #{tpu_custom_call.1} parent=1 // pred_check_branch
      %29 = sbr.rel (0) target = $region17
    $region16: #{tpu_custom_call.1} parent=1 // pred_region
      _
    $region17: #{tpu_custom_call.1} parent=1 // pred_fallthru
      _
    // Predicated region
    $region18: #{tpu_custom_call.1} parent=1 // pred_check
      _
    $region19: #{tpu_custom_call.1} parent=1 // pred_check_branch
      %31 = sbr.rel (0) target = $region21
    $region20: #{tpu_custom_call.1} parent=1 // pred_region
      _
    $region21: #{tpu_custom_call.1} parent=1 // pred_fallthru
      _
    // Predicated region
    $region22: #{tpu_custom_call.1} parent=1 // pred_check
      _
    $region23: #{tpu_custom_call.1} parent=1 // pred_check_branch
      %33 = sbr.rel (0) target = $region25
    $region24: #{tpu_custom_call.1} parent=1 // pred_region
      _
    $region25: #{tpu_custom_call.1} parent=1 // pred_fallthru
      _
    // Predicated region
    $region26: #{tpu_custom_call.1} parent=1 // pred_check
      _
    $region27: #{tpu_custom_call.1} parent=1 // pred_check_branch
      %35 = sbr.rel (0) target = $region29
    $region28: #{tpu_custom_call.1} parent=1 // pred_region
      _
    $region29: #{tpu_custom_call.1} parent=1 // pred_fallthru
      _
    // Predicated region
    $region30: #{tpu_custom_call.1} parent=1 // pred_check
      _
    $region31: #{tpu_custom_call.1} parent=1 // pred_check_branch
      %37 = sbr.rel (0) target = $region33
    $region32: #{tpu_custom_call.1} parent=1 // pred_region
      %38 = dma.done [#allocation3], 128
    $region33: #{tpu_custom_call.1} parent=1 // pred_fallthru
      _
    %v39 = vld [vmem:[#allocation2] sm:$0xff]
    %v40 = vld [vmem:[%s1] sm:$0xff]
    %v41 = vld [vmem:[%s1 + $0x8] sm:$0xff]
    %v42 = vld [vmem:[%s2] sm:$0x1]
    %v44 = vlaneseq
    %v45 = vshrl.u32 %v44, 7
    %v46 = vsub.s32 0, %v45
    %v47 = vrot.slane %v42, %v46
    %vm49 = vcmask 130048
    %v51 = vsel %vm49, %v39, 0
    %53 = vmatprep.subr.mxu0 0.0
    %54 = vmatpush1.msra.mxu0 %v40
    %55 = vmatprep.subr.mxu0 0.0
    %56 = vmatpush1.msra.mxu0 %v41
    %57 = vmatprep.subr.mxu0 0.0
    %58 = vmatpush1.msra.mxu0 0.0
    %59 = vmatprep.subr.mxu0 0.0
    %60 = vmatpush1.msra.mxu0 0.0
    %61 = vmatprep.subr.mxu0 0.0
    %62 = vmatpush1.msra.mxu0 0.0
    %63 = vmatprep.subr.mxu0 0.0
    %64 = vmatpush1.msra.mxu0 0.0
    %65 = vmatprep.subr.mxu0 0.0
    %66 = vmatpush1.msra.mxu0 0.0
    %67 = vmatprep.subr.mxu0 0.0
    %68 = vmatpush1.msra.mxu0 0.0
    %69 = vmatprep.subr.mxu0 0.0
    %70 = vmatpush1.msra.mxu0 0.0
    %71 = vmatprep.subr.mxu0 0.0
    %72 = vmatpush1.msra.mxu0 0.0
    %73 = vmatprep.subr.mxu0 0.0
    %74 = vmatpush1.msra.mxu0 0.0
    %75 = vmatprep.subr.mxu0 0.0
    %76 = vmatpush1.msra.mxu0 0.0
    %77 = vmatprep.subr.mxu0 0.0
    %78 = vmatpush1.msra.mxu0 0.0
    %79 = vmatprep.subr.mxu0 0.0
    %80 = vmatpush1.msra.mxu0 0.0
    %81 = vmatprep.subr.mxu0 0.0
    %82 = vmatpush1.msra.mxu0 0.0
    %83 = vmatprep.subr.mxu0 0.0
    %84 = vmatpush1.msra.mxu0 0.0
    %85 = vmatprep.subr.mxu0 0.0
    %86 = vmatpush1.msra.mxu0 0.0
    %87 = vmatprep.subr.mxu0 0.0
    %88 = vmatpush1.msra.mxu0 0.0
    %89 = vmatprep.subr.mxu0 0.0
    %90 = vmatpush1.msra.mxu0 0.0
    %91 = vmatprep.subr.mxu0 0.0
    %92 = vmatpush1.msra.mxu0 0.0
    %93 = vmatprep.subr.mxu0 0.0
    %94 = vmatpush1.msra.mxu0 0.0
    %95 = vmatprep.subr.mxu0 0.0
    %96 = vmatpush1.msra.mxu0 0.0
    %97 = vmatprep.subr.mxu0 0.0
    %98 = vmatpush1.msra.mxu0 0.0
    %99 = vmatprep.subr.mxu0 0.0
    %100 = vmatpush1.msra.mxu0 0.0
    %101 = vmatprep.subr.mxu0 0.0
    %102 = vmatpush1.msra.mxu0 0.0
    %103 = vmatprep.subr.mxu0 0.0
    %104 = vmatpush1.msra.mxu0 0.0
    %105 = vmatprep.subr.mxu0 0.0
    %106 = vmatpush1.msra.mxu0 0.0
    %107 = vmatprep.subr.mxu0 0.0
    %108 = vmatpush1.msra.mxu0 0.0
    %109 = vmatprep.subr.mxu0 0.0
    %110 = vmatpush1.msra.mxu0 0.0
    %111 = vmatprep.subr.mxu0 0.0
    %112 = vmatpush1.msra.mxu0 0.0
    %113 = vmatprep.subr.mxu0 0.0
    %114 = vmatpush1.msra.mxu0 0.0
    %115 = vmatprep.subr.mxu0 0.0
    %116 = vmatpush1.msra.mxu0 0.0
    %117 = vmatprep.mubr.f32.mxu0 0.0
    %118 = vmatmul.mubr.f32.gmra.mrb[0].mxu0 %v51
    %v119 = vpop.f32.mrb[0].mxu0
    %v120 = vadd.f32 %v47, %v119
    %v121 = vpop.f32.mrb[0].mxu0
    %122 = vdwg.mxu0
    %v123 = vld [vmem:[%s3] sm:$0xff]
    %v124 = vld [vmem:[%s3 + $0x8] sm:$0xff]
    %v125 = vld [vmem:[%s3 + $0x10] sm:$0xff]
    %v126 = vld [vmem:[%s3 + $0x18] sm:$0xff]
    %v127 = vld [vmem:[%s4] sm:$0x1]
    %v129 = vlaneseq
    %v130 = vshrl.u32 %v129, 7
    %v131 = vsub.s32 0, %v130
    %v132 = vrot.slane %v127, %v131
    %vm134 = vcmask 261120
    %v136 = vsel %vm134, %v120, 0
    %138 = vmatprep.subr.mxu0 0.0
    %139 = vmatpush1.msra.mxu0 %v123
    %140 = vmatprep.subr.mxu0 0.0
    %141 = vmatpush1.msra.mxu0 %v124
    %142 = vmatprep.subr.mxu0 0.0
    %143 = vmatpush1.msra.mxu0 %v125
    %144 = vmatprep.subr.mxu0 0.0
    %145 = vmatpush1.msra.mxu0 %v126
    %146 = vmatprep.subr.mxu0 0.0
    %147 = vmatpush1.msra.mxu0 0.0
    %148 = vmatprep.subr.mxu0 0.0
    %149 = vmatpush1.msra.mxu0 0.0
    %150 = vmatprep.subr.mxu0 0.0
    %151 = vmatpush1.msra.mxu0 0.0
    %152 = vmatprep.subr.mxu0 0.0
    %153 = vmatpush1.msra.mxu0 0.0
    %154 = vmatprep.subr.mxu0 0.0
    %155 = vmatpush1.msra.mxu0 0.0
    %156 = vmatprep.subr.mxu0 0.0
    %157 = vmatpush1.msra.mxu0 0.0
    %158 = vmatprep.subr.mxu0 0.0
    %159 = vmatpush1.msra.mxu0 0.0
    %160 = vmatprep.subr.mxu0 0.0
    %161 = vmatpush1.msra.mxu0 0.0
    %162 = vmatprep.subr.mxu0 0.0
    %163 = vmatpush1.msra.mxu0 0.0
    %164 = vmatprep.subr.mxu0 0.0
    %165 = vmatpush1.msra.mxu0 0.0
    %166 = vmatprep.subr.mxu0 0.0
    %167 = vmatpush1.msra.mxu0 0.0
    %168 = vmatprep.subr.mxu0 0.0
    %169 = vmatpush1.msra.mxu0 0.0
    %170 = vmatprep.subr.mxu0 0.0
    %171 = vmatpush1.msra.mxu0 0.0
    %172 = vmatprep.subr.mxu0 0.0
    %173 = vmatpush1.msra.mxu0 0.0
    %174 = vmatprep.subr.mxu0 0.0
    %175 = vmatpush1.msra.mxu0 0.0
    %176 = vmatprep.subr.mxu0 0.0
    %177 = vmatpush1.msra.mxu0 0.0
    %178 = vmatprep.subr.mxu0 0.0
    %179 = vmatpush1.msra.mxu0 0.0
    %180 = vmatprep.subr.mxu0 0.0
    %181 = vmatpush1.msra.mxu0 0.0
    %182 = vmatprep.subr.mxu0 0.0
    %183 = vmatpush1.msra.mxu0 0.0
    %184 = vmatprep.subr.mxu0 0.0
    %185 = vmatpush1.msra.mxu0 0.0
    %186 = vmatprep.subr.mxu0 0.0
    %187 = vmatpush1.msra.mxu0 0.0
    %188 = vmatprep.subr.mxu0 0.0
    %189 = vmatpush1.msra.mxu0 0.0
    %190 = vmatprep.subr.mxu0 0.0
    %191 = vmatpush1.msra.mxu0 0.0
    %192 = vmatprep.subr.mxu0 0.0
    %193 = vmatpush1.msra.mxu0 0.0
    %194 = vmatprep.subr.mxu0 0.0
    %195 = vmatpush1.msra.mxu0 0.0
    %196 = vmatprep.subr.mxu0 0.0
    %197 = vmatpush1.msra.mxu0 0.0
    %198 = vmatprep.subr.mxu0 0.0
    %199 = vmatpush1.msra.mxu0 0.0
    %200 = vmatprep.subr.mxu0 0.0
    %201 = vmatpush1.msra.mxu0 0.0
    %202 = vmatprep.mubr.f32.mxu0 0.0
    %203 = vmatmul.mubr.f32.gmra.mrb[0].mxu0 %v136
    %v204 = vpop.f32.mrb[0].mxu0
    %v205 = vadd.f32 %v132, %v204
    %v206 = vpop.f32.mrb[0].mxu0
    %207 = vdwg.mxu0
    %v208 = vld [vmem:[%s5] sm:$0xff]
    %v209 = vld [vmem:[%s5 + $0x8] sm:$0xff]
    %v210 = vld [vmem:[%s5 + $0x10] sm:$0xff]
    %v211 = vld [vmem:[%s5 + $0x18] sm:$0xff]
    %v212 = vld [vmem:[%s6] sm:$0x1]
    %v214 = vlaneseq
    %v215 = vshrl.u32 %v214, 7
    %v216 = vsub.s32 0, %v215
    %v217 = vrot.slane %v212, %v216
    %v220 = vsel %vm134, %v205, 0
    %222 = vmatprep.subr.mxu0 0.0
    %223 = vmatpush1.msra.mxu0 %v208
    %224 = vmatprep.subr.mxu0 0.0
    %225 = vmatpush1.msra.mxu0 %v209
    %226 = vmatprep.subr.mxu0 0.0
    %227 = vmatpush1.msra.mxu0 %v210
    %228 = vmatprep.subr.mxu0 0.0
    %229 = vmatpush1.msra.mxu0 %v211
    %230 = vmatprep.subr.mxu0 0.0
    %231 = vmatpush1.msra.mxu0 0.0
    %232 = vmatprep.subr.mxu0 0.0
    %233 = vmatpush1.msra.mxu0 0.0
    %234 = vmatprep.subr.mxu0 0.0
    %235 = vmatpush1.msra.mxu0 0.0
    %236 = vmatprep.subr.mxu0 0.0
    %237 = vmatpush1.msra.mxu0 0.0
    %238 = vmatprep.subr.mxu0 0.0
    %239 = vmatpush1.msra.mxu0 0.0
    %240 = vmatprep.subr.mxu0 0.0
    %241 = vmatpush1.msra.mxu0 0.0
    %242 = vmatprep.subr.mxu0 0.0
    %243 = vmatpush1.msra.mxu0 0.0
    %244 = vmatprep.subr.mxu0 0.0
    %245 = vmatpush1.msra.mxu0 0.0
    %246 = vmatprep.subr.mxu0 0.0
    %247 = vmatpush1.msra.mxu0 0.0
    %248 = vmatprep.subr.mxu0 0.0
    %249 = vmatpush1.msra.mxu0 0.0
    %250 = vmatprep.subr.mxu0 0.0
    %251 = vmatpush1.msra.mxu0 0.0
    %252 = vmatprep.subr.mxu0 0.0
    %253 = vmatpush1.msra.mxu0 0.0
    %254 = vmatprep.subr.mxu0 0.0
    %255 = vmatpush1.msra.mxu0 0.0
    %256 = vmatprep.subr.mxu0 0.0
    %257 = vmatpush1.msra.mxu0 0.0
    %258 = vmatprep.subr.mxu0 0.0
    %259 = vmatpush1.msra.mxu0 0.0
    %260 = vmatprep.subr.mxu0 0.0
    %261 = vmatpush1.msra.mxu0 0.0
    %262 = vmatprep.subr.mxu0 0.0
    %263 = vmatpush1.msra.mxu0 0.0
    %264 = vmatprep.subr.mxu0 0.0
    %265 = vmatpush1.msra.mxu0 0.0
    %266 = vmatprep.subr.mxu0 0.0
    %267 = vmatpush1.msra.mxu0 0.0
    %268 = vmatprep.subr.mxu0 0.0
    %269 = vmatpush1.msra.mxu0 0.0
    %270 = vmatprep.subr.mxu0 0.0
    %271 = vmatpush1.msra.mxu0 0.0
    %272 = vmatprep.subr.mxu0 0.0
    %273 = vmatpush1.msra.mxu0 0.0
    %274 = vmatprep.subr.mxu0 0.0
    %275 = vmatpush1.msra.mxu0 0.0
    %276 = vmatprep.subr.mxu0 0.0
    %277 = vmatpush1.msra.mxu0 0.0
    %278 = vmatprep.subr.mxu0 0.0
    %279 = vmatpush1.msra.mxu0 0.0
    %280 = vmatprep.subr.mxu0 0.0
    %281 = vmatpush1.msra.mxu0 0.0
    %282 = vmatprep.subr.mxu0 0.0
    %283 = vmatpush1.msra.mxu0 0.0
    %284 = vmatprep.subr.mxu0 0.0
    %285 = vmatpush1.msra.mxu0 0.0
    %286 = vmatprep.mubr.f32.mxu0 0.0
    %287 = vmatmul.mubr.f32.gmra.mrb[0].mxu0 %v220
    %v288 = vpop.f32.mrb[0].mxu0
    %v289 = vadd.f32 %v217, %v288
    %v290 = vpop.f32.mrb[0].mxu0
    %291 = vdwg.mxu0
    %292 = vst.msk [vmem:[#allocation5] sm:$0xff] %vm49, %v289
    // Predicated region
    $region34: #{tpu_custom_call.1} parent=1 // pred_check
      _
    $region35: #{tpu_custom_call.1} parent=1 // pred_check_branch
      %294 = sbr.rel (0) target = $region37
    $region36: #{tpu_custom_call.1} parent=1 // pred_region
      %s296 = ssub.s32 128, 128
      %297 = vsyncadd [#allocation4], %s296
      %s299 = sshll.u32 [#allocation5], 4
      %s300 = int_to_ptr.vmem [resolvable:$true] %s299
      %302 = dma.vmem_to_hbm [thread:$0]  %s300, 128, %s7, [#allocation4]
    $region37: #{tpu_custom_call.1} parent=1 // pred_fallthru
      _
    // Predicated region
    $region38: #{tpu_custom_call.1} parent=1 // pred_check
      _
    $region39: #{tpu_custom_call.1} parent=1 // pred_check_branch
      %304 = sbr.rel (0) target = $region41
    $region40: #{tpu_custom_call.1} parent=1 // pred_region
      %305 = dma.done [#allocation4], 128
    $region41: #{tpu_custom_call.1} parent=1 // pred_fallthru
      _
    %306 = vsyncpa [#allocation3], 1
    %307 = vsyncpa [#allocation4], 1

</llo_original>
